<compile_context>
chip_gen: v6e
topology: v6e:2x2x1
jax: 0.10.0
libtpu: 0.0.40
codegen_flags: <defaults>
</compile_context>

<pallas_src>
import functools
import math

import jax
import jax.numpy as jnp
from jax.experimental import pallas as pl
from jax.experimental.pallas import tpu as pltpu

_VMEM_LIMIT_BYTES = 32 * 1024 * 1024


def _round_up(v, m):
    return -(-v // m) * m


# --------------------------------------------------------------------------
# Kernel
# --------------------------------------------------------------------------
def _modulation_kernel(x_ref, mprev_ref, mnext_ref, wmid_ref, wprev_ref,
                       wnext_ref, bc_ref, wg_ref, bg_ref, wb_ref, bb_ref,
                       o_ref, *, Bblk, Tr):
    f32 = jnp.float32
    x = x_ref[...].astype(f32)                     # (Rb, C), C = k*F lane-dense
    Rb = x.shape[0]

    # 3-tap conv as three matmuls sharing the same lane-dense LHS.
    y_mid = jnp.dot(x, wmid_ref[...], preferred_element_type=f32)   # (Rb, kN)
    y_up = jnp.dot(x, wprev_ref[...], preferred_element_type=f32)   # row r feeds conv row r+1
    y_dn = jnp.dot(x, wnext_ref[...], preferred_element_type=f32)   # row r feeds conv row r-1

    # Cross-row taps: roll the small (Rb, kN) results (non-negative shifts
    # only) and kill rows that would cross a batch / zero-padding boundary
    # with the precomputed (Rb, 1) masks.
    conv = y_mid + bc_ref[...]
    conv = conv + mprev_ref[...] * pltpu.roll(y_up, shift=1, axis=0)
    conv = conv + mnext_ref[...] * pltpu.roll(y_dn, shift=Rb - 1, axis=0)
    relu = jnp.maximum(conv, 0.0)                                    # (Rb, kN)

    # Per-batch time sum (the 1/T mean is folded into wg / wb host-side).
    if Bblk == 1:
        s = jnp.sum(relu, axis=0, keepdims=True)                     # (1, kN)
    elif Tr % 8 == 0:
        s = jnp.sum(relu.reshape(Bblk, Tr, relu.shape[-1]), axis=1)  # (Bblk, kN)
    else:
        # Rare fallback (the block chooser keeps Bblk small here).
        b_i = jax.lax.broadcasted_iota(jnp.int32, (Bblk, Rb), 0)
        r_i = jax.lax.broadcasted_iota(jnp.int32, (Bblk, Rb), 1)
        seg = jnp.where((r_i >= b_i * Tr) & (r_i < (b_i + 1) * Tr), 1.0, 0.0)
        s = jnp.dot(seg, relu, preferred_element_type=f32)

    # Two separate head matmuls -> no unaligned gamma/beta lane slice.
    gamma = jnp.dot(s, wg_ref[...], preferred_element_type=f32) + bg_ref[...]  # (Bblk, C)
    beta = jnp.dot(s, wb_ref[...], preferred_element_type=f32) + bb_ref[...]   # (Bblk, C)

    # FiLM epilogue, single fused store (one vst slot on v5e).
    if Bblk == 1:
        out = x * gamma + beta
    elif Tr % 8 == 0:
        C = x.shape[-1]
        out = (x.reshape(Bblk, Tr, C) * gamma[:, None, :]
               + beta[:, None, :]).reshape(Rb, C)
    else:
        r_i = jax.lax.broadcasted_iota(jnp.int32, (Rb, Bblk), 0)
        b_i = jax.lax.broadcasted_iota(jnp.int32, (Rb, Bblk), 1)
        onehot = jnp.where((r_i >= b_i * Tr) & (r_i < (b_i + 1) * Tr), 1.0, 0.0)
        out = (x * jnp.dot(onehot, gamma, preferred_element_type=f32)
               + jnp.dot(onehot, beta, preferred_element_type=f32))
    o_ref[...] = out.astype(o_ref.dtype)


# --------------------------------------------------------------------------
# Host-side plumbing
# --------------------------------------------------------------------------
def _packing_factor(T, F):
    """k consecutive time steps per 128-lane row (k = 1 if F doesn't divide 128)."""
    if F <= 128 and 128 % F == 0:
        k = 128 // F
        while k > 1 and T % k:
            k //= 2
        return k
    return 1


def _fuse_params(params, *, k, T):
    """Fold the conv taps, the 1/T time mean, and the k-fold lane tiling of the
    gamma/beta heads into a handful of small host-built matrices."""
    w_conv = jnp.asarray(params["w_conv"], jnp.float32)      # (N, F, 3)
    N, F, _ = w_conv.shape
    kN, kF = k * N, k * F
    w0, w1, w2 = (w_conv[:, :, i].T for i in range(3))       # each (F, N)

    wmid = jnp.zeros((kF, kN), jnp.float32)
    wprev = jnp.zeros((kF, kN), jnp.float32)
    wnext = jnp.zeros((kF, kN), jnp.float32)
    for j in range(k):                      # output time-slot j within a row
        wmid = wmid.at[j * F:(j + 1) * F, j * N:(j + 1) * N].add(w1)
        if j > 0:                           # "t-1" tap stays inside the row
            wmid = wmid.at[(j - 1) * F:j * F, j * N:(j + 1) * N].add(w0)
        if j < k - 1:                       # "t+1" tap stays inside the row
            wmid = wmid.at[(j + 1) * F:(j + 2) * F, j * N:(j + 1) * N].add(w2)
    # Taps that cross a packed-row boundary.
    wprev = wprev.at[(k - 1) * F:, :N].set(w0)     # last slot of row r-1 -> slot 0
    wnext = wnext.at[:F, (k - 1) * N:].set(w2)     # first slot of row r+1 -> slot k-1

    b_conv = jnp.asarray(params["b_conv"], jnp.float32)
    w_gamma = jnp.asarray(params["w_gamma"], jnp.float32)    # (F, N)
    w_beta = jnp.asarray(params["w_beta"], jnp.float32)
    b_gamma = jnp.asarray(params["b_gamma"], jnp.float32)
    b_beta = jnp.asarray(params["b_beta"], jnp.float32)

    return {
        "wmid": wmid, "wprev": wprev, "wnext": wnext,
        "bc": jnp.tile(b_conv, k).reshape(1, kN),
        # Head weights (kN, kF): the per-slot sum, the 1/T mean and the k-fold
        # lane tiling of gamma/beta are all folded in.
        "wg": jnp.tile(w_gamma.T / T, (k, k)),
        "wb": jnp.tile(w_beta.T / T, (k, k)),
        "bg": jnp.tile(b_gamma, k).reshape(1, kF),
        "bb": jnp.tile(b_beta, k).reshape(1, kF),
    }


def _choose_block_batches(B, Tr, C, itemsize, *, vmem_limit_bytes):
    """Batches per grid step, sized against the real (padded, double-buffered)
    VMEM footprint.  Blocks always hold whole batch elements."""
    m = 8 // math.gcd(Tr, 8)              # grid > 1 needs (Bblk * Tr) % 8 == 0
    lanes = _round_up(C, 128)
    budget = (vmem_limit_bytes * 3) // 4  # headroom under the scoped limit

    def footprint(bblk):
        rows = _round_up(bblk * Tr, 8)
        slab = rows * lanes * itemsize            # one x (or out) block
        interm = rows * lanes * 4                 # f32 conv / relu / film temporaries
        return 4 * slab + 3 * interm + (2 << 20)  # 2x(in+out) dbl-buffer + weights

    cands = sorted(set(range(m, B + 1, m)) | {B})
    if Tr % 8:  # segment-sum fallback path in-kernel: keep its temporaries tiny
        capped = [c for c in cands if c <= max(m, 64)]
        cands = capped or cands[:1]
    fitting = [c for c in cands if footprint(c) <= budget] or [cands[0]]

    def waste(c):                         # batches added by padding B up to grid*c
        return _round_up(B, c) - B

    good = [c for c in fitting if waste(c) * 8 <= max(B, 8)]
    best = max(good or fitting)
    # Prefer >= 2 grid steps so both v7x TensorCores get work; on v5e/v6e the
    # extra step only costs ~0.35 us and the blocks stay large.
    if _round_up(B, best) // best < 2:
        multi = [c for c in fitting
                 if _round_up(B, c) // c >= 2 and waste(c) * 8 <= max(B, 8)]
        if multi:
            best = max(multi)
    return best


def noise_aware_feature_modulation(x, params, *, block_batch=None):
    """x: (B, T, F).  params: PyTorch-shaped weights (see init_params)."""
    B, T, F = x.shape
    k = _packing_factor(T, F)
    Tr = T // k                     # packed rows per batch element
    C = k * F                       # lanes per packed row (128 when F divides 128)

    fused = _fuse_params(params, k=k, T=T)

    Bblk = block_batch if block_batch is not None else _choose_block_batches(
        B, Tr, C, x.dtype.itemsize, vmem_limit_bytes=_VMEM_LIMIT_BYTES)
    assert Bblk >= 1
    grid = _round_up(B, Bblk) // Bblk
    if grid > 1 and (Bblk * Tr) % 8 != 0:
        raise ValueError(
            f"block_batch={Bblk} gives {Bblk * Tr} rows per block; blocks need "
            "a multiple of 8 rows when the grid has more than one step")

    Bpad = grid * Bblk
    if Bpad != B:                   # awkward B: pad with zero batches, drop later
        x = jnp.concatenate([x, jnp.zeros((Bpad - B, T, F), x.dtype)], axis=0)

    x2 = x.reshape(Bpad * Tr, C)    # contiguous, metadata-only reshape
    Rb = Bblk * Tr

    # Per-row conv boundary masks for ONE block (identical for every grid step,
    # so they are replicated and stay resident in VMEM).
    q = jnp.arange(Rb, dtype=jnp.int32) % Tr
    mprev = (q != 0).astype(jnp.float32).reshape(Rb, 1)
    mnext = (q != Tr - 1).astype(jnp.float32).reshape(Rb, 1)

    rep = lambda shape: pl.BlockSpec(shape, lambda g: (0, 0))

    out2 = pl.pallas_call(
        functools.partial(_modulation_kernel, Bblk=Bblk, Tr=Tr),
        out_shape=jax.ShapeDtypeStruct((Bpad * Tr, C), x.dtype),
        grid=(grid,),
        in_specs=[
            pl.BlockSpec((Rb, C), lambda g: (g, 0)),   # x slab (lane-dense)
            rep((Rb, 1)),                              # prev-row boundary mask
            rep((Rb, 1)),                              # next-row boundary mask
            rep(fused["wmid"].shape),                  # (C, kN)
            rep(fused["wprev"].shape),                 # (C, kN)
            rep(fused["wnext"].shape),                 # (C, kN)
            rep(fused["bc"].shape),                    # (1, kN)
            rep(fused["wg"].shape),                    # (kN, C)
            rep(fused["bg"].shape),                    # (1, C)
            rep(fused["wb"].shape),                    # (kN, C)
            rep(fused["bb"].shape),                    # (1, C)
        ],
        out_specs=pl.BlockSpec((Rb, C), lambda g: (g, 0)),
        compiler_params=pltpu.CompilerParams(
            dimension_semantics=("parallel",),
            vmem_limit_bytes=_VMEM_LIMIT_BYTES,
        ),
    )(x2, mprev, mnext, fused["wmid"], fused["wprev"], fused["wnext"],
      fused["bc"], fused["wg"], fused["bg"], fused["wb"], fused["bb"])

    out = out2.reshape(Bpad, T, F)
    return out[:B] if Bpad != B else out


# --------------------------------------------------------------------------
# Reference + params
# --------------------------------------------------------------------------
def _reference(x, p):
    """Pure-JAX reference mirroring the PyTorch forward."""
    w = p["w_conv"]                                        # (N, F, 3)
    x_prev = jnp.pad(x, ((0, 0), (1, 0), (0, 0)))[:, :-1]
    x_next = jnp.pad(x, ((0, 0), (0, 1), (0, 0)))[:, 1:]
    conv = (x_prev @ w[:, :, 0].T + x @ w[:, :, 1].T + x_next @ w[:, :, 2].T
            + p["b_conv"])                                 # (B, T, N)
    conv = jnp.maximum(conv, 0.0)
    noise = jnp.mean(conv, axis=1)                         # (B, N)
    gamma = noise @ p["w_gamma"].T + p["b_gamma"]          # (B, F)
    beta = noise @ p["w_beta"].T + p["b_beta"]             # (B, F)
    return x * gamma[:, None, :] + beta[:, None, :]


def init_params(key, feature_dim, noise_dim=16):
    ks = jax.random.split(key, 6)
    # PyTorch shapes: conv W (N, F, 3), conv b (N,), linear W (F, N), b (F,)
    return {
        "w_conv": jax.random.normal(ks[0], (noise_dim, feature_dim, 3),
                                    jnp.float32) * 0.1,
        "b_conv": jax.random.normal(ks[1], (noise_dim,), jnp.float32) * 0.1,
        "w_gamma": jax.random.normal(ks[2], (feature_dim, noise_dim),
                                     jnp.float32) * 0.1,
        "b_gamma": jax.random.normal(ks[3], (feature_dim,), jnp.float32) * 0.1,
        "w_beta": jax.random.normal(ks[4], (feature_dim, noise_dim),
                                    jnp.float32) * 0.1,
        "b_beta": jax.random.normal(ks[5], (feature_dim,), jnp.float32) * 0.1,
    }


if __name__ == "__main__":
    key = jax.random.PRNGKey(0)
    k_x, k_p = jax.random.split(key)

    B, T, F, N = 4, 32, 32, 16
    x = jax.random.normal(k_x, (B, T, F), jnp.float32)
    params = init_params(k_p, feature_dim=F, noise_dim=N)
    ref = _reference(x, params)

    # Main path: auto blocking -> lane-dense packing (k=4), 2 batches/block, grid=2.
    out = jax.block_until_ready(noise_aware_feature_modulation(x, params))
    assert out.shape == (B, T, F)
    assert jnp.allclose(out, ref, rtol=2e-3, atol=2e-3), "mismatch (auto blocking)"

    # One-batch-per-block path (grid = B).
    out1 = jax.block_until_ready(
        noise_aware_feature_modulation(x, params, block_batch=1))
    assert jnp.allclose(out1, ref, rtol=2e-3, atol=2e-3), "mismatch (block_batch=1)"

    # Awkward batch count -> padded up to a whole number of blocks, then dropped.
    x3 = x[:3]
    out3 = jax.block_until_ready(noise_aware_feature_modulation(x3, params))
    assert jnp.allclose(out3, _reference(x3, params), rtol=2e-3, atol=2e-3), \
        "mismatch (padded batch)"

    print("KERNEL_OK")
</pallas_src>

<mosaic_0001>
module attributes {stable_mosaic.version = 11 : i64} {
  func.func @_modulation_kernel(%arg0: i32, %arg1: memref<16x128xf32, #tpu.memory_space<vmem>>, %arg2: memref<16x1xf32, #tpu.memory_space<vmem>>, %arg3: memref<16x1xf32, #tpu.memory_space<vmem>>, %arg4: memref<128x64xf32, #tpu.memory_space<vmem>>, %arg5: memref<128x64xf32, #tpu.memory_space<vmem>>, %arg6: memref<128x64xf32, #tpu.memory_space<vmem>>, %arg7: memref<1x64xf32, #tpu.memory_space<vmem>>, %arg8: memref<64x128xf32, #tpu.memory_space<vmem>>, %arg9: memref<1x128xf32, #tpu.memory_space<vmem>>, %arg10: memref<64x128xf32, #tpu.memory_space<vmem>>, %arg11: memref<1x128xf32, #tpu.memory_space<vmem>>, %arg12: memref<16x128xf32, #tpu.memory_space<vmem>>) attributes {dimension_semantics = [#tpu.dimension_semantics<parallel>], iteration_bounds = array<i64: 2>, scalar_prefetch = 0 : i64, scratch_operands = 0 : i64, tpu.core_type = #tpu.core_type<tc>, window_params = [{transform_indices = @transform_0, window_bounds = array<i64: 16, 128>}, {pipeline_mode = #tpu.pipeline_mode<synchronous>, transform_indices = @transform_1, window_bounds = array<i64: 16, 1>}, {pipeline_mode = #tpu.pipeline_mode<synchronous>, transform_indices = @transform_2, window_bounds = array<i64: 16, 1>}, {pipeline_mode = #tpu.pipeline_mode<synchronous>, transform_indices = @transform_3, window_bounds = array<i64: 128, 64>}, {pipeline_mode = #tpu.pipeline_mode<synchronous>, transform_indices = @transform_4, window_bounds = array<i64: 128, 64>}, {pipeline_mode = #tpu.pipeline_mode<synchronous>, transform_indices = @transform_5, window_bounds = array<i64: 128, 64>}, {pipeline_mode = #tpu.pipeline_mode<synchronous>, transform_indices = @transform_6, window_bounds = array<i64: 1, 64>}, {pipeline_mode = #tpu.pipeline_mode<synchronous>, transform_indices = @transform_7, window_bounds = array<i64: 64, 128>}, {pipeline_mode = #tpu.pipeline_mode<synchronous>, transform_indices = @transform_8, window_bounds = array<i64: 1, 128>}, {pipeline_mode = #tpu.pipeline_mode<synchronous>, transform_indices = @transform_9, window_bounds = array<i64: 64, 128>}, {pipeline_mode = #tpu.pipeline_mode<synchronous>, transform_indices = @transform_10, window_bounds = array<i64: 1, 128>}, {transform_indices = @transform_11, window_bounds = array<i64: 16, 128>}]} {
    %c0 = arith.constant 0 : index
    %c0_0 = arith.constant 0 : index
    %0 = vector.load %arg1[%c0, %c0_0] : memref<16x128xf32, #tpu.memory_space<vmem>>, vector<16x128xf32>
    %c0_1 = arith.constant 0 : index
    %c0_2 = arith.constant 0 : index
    %1 = vector.load %arg4[%c0_1, %c0_2] : memref<128x64xf32, #tpu.memory_space<vmem>>, vector<128x64xf32>
    %cst = arith.constant dense<0.000000e+00> : vector<16x64xf32>
    %2 = tpu.matmul %0, %1, %cst {dimension_numbers = #tpu.dot_dimension_numbers<[1], [0], [0], [1], [0, 0, 1, 1], [], []>} : vector<16x128xf32>, vector<128x64xf32>, vector<16x64xf32> -> vector<16x64xf32>
    %c0_3 = arith.constant 0 : index
    %c0_4 = arith.constant 0 : index
    %3 = vector.load %arg5[%c0_3, %c0_4] : memref<128x64xf32, #tpu.memory_space<vmem>>, vector<128x64xf32>
    %cst_5 = arith.constant dense<0.000000e+00> : vector<16x64xf32>
    %4 = tpu.matmul %0, %3, %cst_5 {dimension_numbers = #tpu.dot_dimension_numbers<[1], [0], [0], [1], [0, 0, 1, 1], [], []>} : vector<16x128xf32>, vector<128x64xf32>, vector<16x64xf32> -> vector<16x64xf32>
    %c0_6 = arith.constant 0 : index
    %c0_7 = arith.constant 0 : index
    %5 = vector.load %arg6[%c0_6, %c0_7] : memref<128x64xf32, #tpu.memory_space<vmem>>, vector<128x64xf32>
    %cst_8 = arith.constant dense<0.000000e+00> : vector<16x64xf32>
    %6 = tpu.matmul %0, %5, %cst_8 {dimension_numbers = #tpu.dot_dimension_numbers<[1], [0], [0], [1], [0, 0, 1, 1], [], []>} : vector<16x128xf32>, vector<128x64xf32>, vector<16x64xf32> -> vector<16x64xf32>
    %c0_9 = arith.constant 0 : index
    %c0_10 = arith.constant 0 : index
    %7 = vector.load %arg7[%c0_9, %c0_10] : memref<1x64xf32, #tpu.memory_space<vmem>>, vector<1x64xf32>
    %8 = vector.broadcast %7 : vector<1x64xf32> to vector<16x64xf32>
    %9 = arith.addf %2, %8 : vector<16x64xf32>
    %c0_11 = arith.constant 0 : index
    %c0_12 = arith.constant 0 : index
    %10 = vector.load %arg2[%c0_11, %c0_12] : memref<16x1xf32, #tpu.memory_space<vmem>>, vector<16x1xf32>
    %c1_i32 = arith.constant 1 : i32
    %11 = tpu.dynamic_rotate %4 by %c1_i32 dim 0 : vector<16x64xf32>, i32 -> vector<16x64xf32>
    %12 = vector.broadcast %10 : vector<16x1xf32> to vector<16x64xf32>
    %13 = arith.mulf %12, %11 : vector<16x64xf32>
    %14 = arith.addf %9, %13 : vector<16x64xf32>
    %c0_13 = arith.constant 0 : index
    %c0_14 = arith.constant 0 : index
    %15 = vector.load %arg3[%c0_13, %c0_14] : memref<16x1xf32, #tpu.memory_space<vmem>>, vector<16x1xf32>
    %c15_i32 = arith.constant 15 : i32
    %16 = tpu.dynamic_rotate %6 by %c15_i32 dim 0 : vector<16x64xf32>, i32 -> vector<16x64xf32>
    %17 = vector.broadcast %15 : vector<16x1xf32> to vector<16x64xf32>
    %18 = arith.mulf %17, %16 : vector<16x64xf32>
    %19 = arith.addf %14, %18 : vector<16x64xf32>
    %cst_15 = arith.constant 0.000000e+00 : f32
    %20 = vector.broadcast %cst_15 : f32 to vector<16x64xf32>
    %21 = arith.maximumf %19, %20 : vector<16x64xf32>
    %22 = vector.shape_cast %21 : vector<16x64xf32> to vector<2x8x64xf32>
    %cst_16 = arith.constant dense<0.000000e+00> : vector<2x64xf32>
    %23 = vector.multi_reduction <add>, %22, %cst_16 [1] : vector<2x8x64xf32> to vector<2x64xf32>
    %c0_17 = arith.constant 0 : index
    %c0_18 = arith.constant 0 : index
    %24 = vector.load %arg8[%c0_17, %c0_18] : memref<64x128xf32, #tpu.memory_space<vmem>>, vector<64x128xf32>
    %cst_19 = arith.constant dense<0.000000e+00> : vector<2x128xf32>
    %25 = tpu.matmul %23, %24, %cst_19 {dimension_numbers = #tpu.dot_dimension_numbers<[1], [0], [0], [1], [0, 0, 1, 1], [], []>} : vector<2x64xf32>, vector<64x128xf32>, vector<2x128xf32> -> vector<2x128xf32>
    %c0_20 = arith.constant 0 : index
    %c0_21 = arith.constant 0 : index
    %26 = vector.load %arg9[%c0_20, %c0_21] : memref<1x128xf32, #tpu.memory_space<vmem>>, vector<1x128xf32>
    %27 = vector.broadcast %26 : vector<1x128xf32> to vector<2x128xf32>
    %28 = arith.addf %25, %27 : vector<2x128xf32>
    %c0_22 = arith.constant 0 : index
    %c0_23 = arith.constant 0 : index
    %29 = vector.load %arg10[%c0_22, %c0_23] : memref<64x128xf32, #tpu.memory_space<vmem>>, vector<64x128xf32>
    %cst_24 = arith.constant dense<0.000000e+00> : vector<2x128xf32>
    %30 = tpu.matmul %23, %29, %cst_24 {dimension_numbers = #tpu.dot_dimension_numbers<[1], [0], [0], [1], [0, 0, 1, 1], [], []>} : vector<2x64xf32>, vector<64x128xf32>, vector<2x128xf32> -> vector<2x128xf32>
    %c0_25 = arith.constant 0 : index
    %c0_26 = arith.constant 0 : index
    %31 = vector.load %arg11[%c0_25, %c0_26] : memref<1x128xf32, #tpu.memory_space<vmem>>, vector<1x128xf32>
    %32 = vector.broadcast %31 : vector<1x128xf32> to vector<2x128xf32>
    %33 = arith.addf %30, %32 : vector<2x128xf32>
    %34 = vector.shape_cast %0 : vector<16x128xf32> to vector<2x8x128xf32>
    %35 = vector.shape_cast %28 : vector<2x128xf32> to vector<2x1x128xf32>
    %36 = vector.broadcast %35 : vector<2x1x128xf32> to vector<2x8x128xf32>
    %37 = arith.mulf %34, %36 : vector<2x8x128xf32>
    %38 = vector.shape_cast %33 : vector<2x128xf32> to vector<2x1x128xf32>
    %39 = vector.broadcast %38 : vector<2x1x128xf32> to vector<2x8x128xf32>
    %40 = arith.addf %37, %39 : vector<2x8x128xf32>
    %41 = vector.shape_cast %40 : vector<2x8x128xf32> to vector<16x128xf32>
    %c0_27 = arith.constant 0 : index
    %c0_28 = arith.constant 0 : index
    %42 = vector.load %arg12[%c0_27, %c0_28] : memref<16x128xf32, #tpu.memory_space<vmem>>, vector<16x128xf32>
    tpu.vector_store %arg12[%c0_27, %c0_28], %41 {strides = array<i32>} : memref<16x128xf32, #tpu.memory_space<vmem>>, vector<16x128xf32>,
    return
  }
  func.func @transform_0(%arg0: i32) -> (i32, i32) {
    %c0_i32 = arith.constant 0 : i32
    %c0_i32_0 = arith.constant 0 : i32
    return %arg0, %c0_i32 : i32, i32
  }
  func.func @transform_1(%arg0: i32) -> (i32, i32) {
    %c0_i32 = arith.constant 0 : i32
    %c0_i32_0 = arith.constant 0 : i32
    %c0_i32_1 = arith.constant 0 : i32
    return %c0_i32, %c0_i32_0 : i32, i32
  }
  func.func @transform_2(%arg0: i32) -> (i32, i32) {
    %c0_i32 = arith.constant 0 : i32
    %c0_i32_0 = arith.constant 0 : i32
    %c0_i32_1 = arith.constant 0 : i32
    return %c0_i32, %c0_i32_0 : i32, i32
  }
  func.func @transform_3(%arg0: i32) -> (i32, i32) {
    %c0_i32 = arith.constant 0 : i32
    %c0_i32_0 = arith.constant 0 : i32
    %c0_i32_1 = arith.constant 0 : i32
    return %c0_i32, %c0_i32_0 : i32, i32
  }
  func.func @transform_4(%arg0: i32) -> (i32, i32) {
    %c0_i32 = arith.constant 0 : i32
    %c0_i32_0 = arith.constant 0 : i32
    %c0_i32_1 = arith.constant 0 : i32
    return %c0_i32, %c0_i32_0 : i32, i32
  }
  func.func @transform_5(%arg0: i32) -> (i32, i32) {
    %c0_i32 = arith.constant 0 : i32
    %c0_i32_0 = arith.constant 0 : i32
    %c0_i32_1 = arith.constant 0 : i32
    return %c0_i32, %c0_i32_0 : i32, i32
  }
  func.func @transform_6(%arg0: i32) -> (i32, i32) {
    %c0_i32 = arith.constant 0 : i32
    %c0_i32_0 = arith.constant 0 : i32
    %c0_i32_1 = arith.constant 0 : i32
    return %c0_i32, %c0_i32_0 : i32, i32
  }
  func.func @transform_7(%arg0: i32) -> (i32, i32) {
    %c0_i32 = arith.constant 0 : i32
    %c0_i32_0 = arith.constant 0 : i32
    %c0_i32_1 = arith.constant 0 : i32
    return %c0_i32, %c0_i32_0 : i32, i32
  }
  func.func @transform_8(%arg0: i32) -> (i32, i32) {
    %c0_i32 = arith.constant 0 : i32
    %c0_i32_0 = arith.constant 0 : i32
    %c0_i32_1 = arith.constant 0 : i32
    return %c0_i32, %c0_i32_0 : i32, i32
  }
  func.func @transform_9(%arg0: i32) -> (i32, i32) {
    %c0_i32 = arith.constant 0 : i32
    %c0_i32_0 = arith.constant 0 : i32
    %c0_i32_1 = arith.constant 0 : i32
    return %c0_i32, %c0_i32_0 : i32, i32
  }
  func.func @transform_10(%arg0: i32) -> (i32, i32) {
    %c0_i32 = arith.constant 0 : i32
    %c0_i32_0 = arith.constant 0 : i32
    %c0_i32_1 = arith.constant 0 : i32
    return %c0_i32, %c0_i32_0 : i32, i32
  }
  func.func @transform_11(%arg0: i32) -> (i32, i32) {
    %c0_i32 = arith.constant 0 : i32
    %c0_i32_0 = arith.constant 0 : i32
    return %arg0, %c0_i32 : i32, i32
  }
}

</mosaic_0001>

<llo_original>
// kernel: tpu_custom_call.1
$region0: #{tpu_custom_call.1}
  #allocation0 [shape = 'u32[]', space=smem, size = 0x4, offset = 0x4, fixed_abs, tag = 'smem constant byte address 0x4 - core index']
  #allocation1 [shape = 'u32[144,128]{1,0:T(1,128)}', space=vmem, size = 0x12000, scoped, tag = 'internal scratch']
  %s0 = inlined_call_operand.vmem [shape: f32[32,128], index: 0, kind: input, shape index: {}]
  %s1 = inlined_call_operand.vmem [shape: f32[16,1], index: 1, kind: input, shape index: {}]
  %s2 = inlined_call_operand.vmem [shape: f32[16,1], index: 2, kind: input, shape index: {}]
  %s3 = inlined_call_operand.vmem [shape: f32[128,64], index: 3, kind: input, shape index: {}]
  %s4 = inlined_call_operand.vmem [shape: f32[128,64], index: 4, kind: input, shape index: {}]
  %s5 = inlined_call_operand.vmem [shape: f32[128,64], index: 5, kind: input, shape index: {}]
  %s6 = inlined_call_operand.vmem [shape: f32[1,64], index: 6, kind: input, shape index: {}]
  %s7 = inlined_call_operand.vmem [shape: f32[64,128], index: 7, kind: input, shape index: {}]
  %s8 = inlined_call_operand.vmem [shape: f32[1,128], index: 8, kind: input, shape index: {}]
  %s9 = inlined_call_operand.vmem [shape: f32[64,128], index: 9, kind: input, shape index: {}]
  %s10 = inlined_call_operand.vmem [shape: f32[1,128], index: 10, kind: input, shape index: {}]
  %s11 = inlined_call_operand.hbm [shape: f32[32,128], index: 11, kind: output, shape index: {}]
  %s12 = sld [smem:[#allocation0]]
  $region77: #{tpu_custom_call.1} parent=0
    _
  %s14 = ssub.s32 1, %s12
  %s15 = scalar_select 0, %s14, %s12
  $region1: #{tpu_custom_call.1} parent=0
    #allocation2 [shape = 'u8[16384]{0}', space=vmem, size = 0x4000, scoped, tag = 'output window, operand 0']
    #allocation3 [shape = 's32[2]{0}', space=sflag, size = 0x8, scoped, tag = 'scoped memory for tpu_custom_call.1']
    %16 = vsyncpa [#allocation3], 0
    %s17 = scalar_lea.sflag [#allocation3], 1
    %18 = vsyncpa %s17, 0
    loop: start=0, step=1, limit=4
    $region2: #{tpu_custom_call.1} parent=1 // loop_pre_header
      _
    $region3: #{tpu_custom_call.1} parent=1 // loop_header
      %s20 = sphi 0, %s24
      %p21 = scmp.ge.s32.totalorder %s20, 4
      %s30 = sphi 0, %s32
      %s33 = sphi 0, %s30
      %s34 = sphi 0, %s33
      %s50 = sphi 0, %s34
      %s54 = sphi 0, %s54
      %s56 = sphi 0, %s54
      %s57 = sphi 0, %s56
      %s71 = sphi 0, %s57
      %s75 = sphi 0, %s75
      %s77 = sphi 0, %s75
      %s78 = sphi 0, %s77
      %s92 = sphi 0, %s78
      %s96 = sphi 0, %s96
      %s98 = sphi 0, %s96
      %s99 = sphi 0, %s98
      %s113 = sphi 0, %s99
      %s117 = sphi 0, %s117
      %s119 = sphi 0, %s117
      %s120 = sphi 0, %s119
      %s134 = sphi 0, %s120
      %s138 = sphi 0, %s138
      %s140 = sphi 0, %s138
      %s141 = sphi 0, %s140
      %s155 = sphi 0, %s141
      %s159 = sphi 0, %s159
      %s161 = sphi 0, %s159
      %s162 = sphi 0, %s161
      %s176 = sphi 0, %s162
      %s180 = sphi 0, %s180
      %s182 = sphi 0, %s180
      %s183 = sphi 0, %s182
      %s197 = sphi 0, %s183
      %s201 = sphi 0, %s201
      %s203 = sphi 0, %s201
      %s204 = sphi 0, %s203
      %s218 = sphi 0, %s204
      %s222 = sphi 0, %s222
      %s224 = sphi 0, %s222
      %s225 = sphi 0, %s224
      %s239 = sphi 0, %s225
      %s243 = sphi 0, %s243
      %s245 = sphi 0, %s243
      %s246 = sphi 0, %s245
      %s260 = sphi 0, %s246
      %s266 = sphi 0, %s268
      %s269 = sphi 0, %s266
      %s270 = sphi 0, %s269
      %s286 = sphi 0, %s270
    $region4: #{tpu_custom_call.1} parent=1 // loop_header_branch
      %23 = sbr.rel (%p21) target = $region8
    $region5: #{tpu_custom_call.1} parent=1 // loop_body
      %s25 = ssub.s32 %s20, 1
      %s26 = ssub.s32 %s20, 2
      %s27 = sadd.s32 %s20, 1
      %s28 = ssub.s32 %s20, %s27
      %p29 = scmp.eq.s32.totalorder %s28, 0
      %s31 = sadd.s32 %s30, 1
      %s32 = scalar_select %p29, %s30, %s31
      %p35 = pneg %p29
      %p36 = scmp.eq.s32.totalorder %s20, 1
      %p37 = por %p35, %p36
      %p38 = scmp.ne.s32.totalorder %s30, %s33
      %p39 = scmp.eq.s32.totalorder %s20, 0
      %p40 = por %p38, %p39
      %p41 = scmp.ne.s32.totalorder %s30, %s33
      %p42 = scmp.eq.s32.totalorder %s25, 1
      %p43 = por %p41, %p42
      %p44 = scmp.ne.s32.totalorder %s33, %s34
      %p45 = scmp.eq.s32.totalorder %s25, 0
      %p46 = por %p44, %p45
      %p47 = scmp.ne.s32.totalorder %s33, %s34
      %p48 = scmp.eq.s32.totalorder %s26, 1
      %p49 = por %p47, %p48
      %p51 = scmp.ne.s32.totalorder %s34, %s50
      %p52 = scmp.eq.s32.totalorder %s26, 0
      %p53 = por %p51, %p52
      %s55 = sadd.s32 %s54, 1
      %p58 = scmp.eq.s32.totalorder %s20, 1
      %p59 = scmp.ne.s32.totalorder %s54, %s56
      %p60 = scmp.eq.s32.totalorder %s20, 0
      %p61 = por %p59, %p60
      %p62 = scmp.ne.s32.totalorder %s54, %s56
      %p63 = scmp.eq.s32.totalorder %s25, 1
      %p64 = por %p62, %p63
      %p65 = scmp.ne.s32.totalorder %s56, %s57
      %p66 = scmp.eq.s32.totalorder %s25, 0
      %p67 = por %p65, %p66
      %p68 = scmp.ne.s32.totalorder %s56, %s57
      %p69 = scmp.eq.s32.totalorder %s26, 1
      %p70 = por %p68, %p69
      %p72 = scmp.ne.s32.totalorder %s57, %s71
      %p73 = scmp.eq.s32.totalorder %s26, 0
      %p74 = por %p72, %p73
      %s76 = sadd.s32 %s75, 1
      %p79 = scmp.eq.s32.totalorder %s20, 1
      %p80 = scmp.ne.s32.totalorder %s75, %s77
      %p81 = scmp.eq.s32.totalorder %s20, 0
      %p82 = por %p80, %p81
      %p83 = scmp.ne.s32.totalorder %s75, %s77
      %p84 = scmp.eq.s32.totalorder %s25, 1
      %p85 = por %p83, %p84
      %p86 = scmp.ne.s32.totalorder %s77, %s78
      %p87 = scmp.eq.s32.totalorder %s25, 0
      %p88 = por %p86, %p87
      %p89 = scmp.ne.s32.totalorder %s77, %s78
      %p90 = scmp.eq.s32.totalorder %s26, 1
      %p91 = por %p89, %p90
      %p93 = scmp.ne.s32.totalorder %s78, %s92
      %p94 = scmp.eq.s32.totalorder %s26, 0
      %p95 = por %p93, %p94
      %s97 = sadd.s32 %s96, 1
      %p100 = scmp.eq.s32.totalorder %s20, 1
      %p101 = scmp.ne.s32.totalorder %s96, %s98
      %p102 = scmp.eq.s32.totalorder %s20, 0
      %p103 = por %p101, %p102
      %p104 = scmp.ne.s32.totalorder %s96, %s98
      %p105 = scmp.eq.s32.totalorder %s25, 1
      %p106 = por %p104, %p105
      %p107 = scmp.ne.s32.totalorder %s98, %s99
      %p108 = scmp.eq.s32.totalorder %s25, 0
      %p109 = por %p107, %p108
      %p110 = scmp.ne.s32.totalorder %s98, %s99
      %p111 = scmp.eq.s32.totalorder %s26, 1
      %p112 = por %p110, %p111
      %p114 = scmp.ne.s32.totalorder %s99, %s113
      %p115 = scmp.eq.s32.totalorder %s26, 0
      %p116 = por %p114, %p115
      %s118 = sadd.s32 %s117, 1
      %p121 = scmp.eq.s32.totalorder %s20, 1
      %p122 = scmp.ne.s32.totalorder %s117, %s119
      %p123 = scmp.eq.s32.totalorder %s20, 0
      %p124 = por %p122, %p123
      %p125 = scmp.ne.s32.totalorder %s117, %s119
      %p126 = scmp.eq.s32.totalorder %s25, 1
      %p127 = por %p125, %p126
      %p128 = scmp.ne.s32.totalorder %s119, %s120
      %p129 = scmp.eq.s32.totalorder %s25, 0
      %p130 = por %p128, %p129
      %p131 = scmp.ne.s32.totalorder %s119, %s120
      %p132 = scmp.eq.s32.totalorder %s26, 1
      %p133 = por %p131, %p132
      %p135 = scmp.ne.s32.totalorder %s120, %s134
      %p136 = scmp.eq.s32.totalorder %s26, 0
      %p137 = por %p135, %p136
      %s139 = sadd.s32 %s138, 1
      %p142 = scmp.eq.s32.totalorder %s20, 1
      %p143 = scmp.ne.s32.totalorder %s138, %s140
      %p144 = scmp.eq.s32.totalorder %s20, 0
      %p145 = por %p143, %p144
      %p146 = scmp.ne.s32.totalorder %s138, %s140
      %p147 = scmp.eq.s32.totalorder %s25, 1
      %p148 = por %p146, %p147
      %p149 = scmp.ne.s32.totalorder %s140, %s141
      %p150 = scmp.eq.s32.totalorder %s25, 0
      %p151 = por %p149, %p150
      %p152 = scmp.ne.s32.totalorder %s140, %s141
      %p153 = scmp.eq.s32.totalorder %s26, 1
      %p154 = por %p152, %p153
      %p156 = scmp.ne.s32.totalorder %s141, %s155
      %p157 = scmp.eq.s32.totalorder %s26, 0
      %p158 = por %p156, %p157
      %s160 = sadd.s32 %s159, 1
      %p163 = scmp.eq.s32.totalorder %s20, 1
      %p164 = scmp.ne.s32.totalorder %s159, %s161
      %p165 = scmp.eq.s32.totalorder %s20, 0
      %p166 = por %p164, %p165
      %p167 = scmp.ne.s32.totalorder %s159, %s161
      %p168 = scmp.eq.s32.totalorder %s25, 1
      %p169 = por %p167, %p168
      %p170 = scmp.ne.s32.totalorder %s161, %s162
      %p171 = scmp.eq.s32.totalorder %s25, 0
      %p172 = por %p170, %p171
      %p173 = scmp.ne.s32.totalorder %s161, %s162
      %p174 = scmp.eq.s32.totalorder %s26, 1
      %p175 = por %p173, %p174
      %p177 = scmp.ne.s32.totalorder %s162, %s176
      %p178 = scmp.eq.s32.totalorder %s26, 0
      %p179 = por %p177, %p178
      %s181 = sadd.s32 %s180, 1
      %p184 = scmp.eq.s32.totalorder %s20, 1
      %p185 = scmp.ne.s32.totalorder %s180, %s182
      %p186 = scmp.eq.s32.totalorder %s20, 0
      %p187 = por %p185, %p186
      %p188 = scmp.ne.s32.totalorder %s180, %s182
      %p189 = scmp.eq.s32.totalorder %s25, 1
      %p190 = por %p188, %p189
      %p191 = scmp.ne.s32.totalorder %s182, %s183
      %p192 = scmp.eq.s32.totalorder %s25, 0
      %p193 = por %p191, %p192
      %p194 = scmp.ne.s32.totalorder %s182, %s183
      %p195 = scmp.eq.s32.totalorder %s26, 1
      %p196 = por %p194, %p195
      %p198 = scmp.ne.s32.totalorder %s183, %s197
      %p199 = scmp.eq.s32.totalorder %s26, 0
      %p200 = por %p198, %p199
      %s202 = sadd.s32 %s201, 1
      %p205 = scmp.eq.s32.totalorder %s20, 1
      %p206 = scmp.ne.s32.totalorder %s201, %s203
      %p207 = scmp.eq.s32.totalorder %s20, 0
      %p208 = por %p206, %p207
      %p209 = scmp.ne.s32.totalorder %s201, %s203
      %p210 = scmp.eq.s32.totalorder %s25, 1
      %p211 = por %p209, %p210
      %p212 = scmp.ne.s32.totalorder %s203, %s204
      %p213 = scmp.eq.s32.totalorder %s25, 0
      %p214 = por %p212, %p213
      %p215 = scmp.ne.s32.totalorder %s203, %s204
      %p216 = scmp.eq.s32.totalorder %s26, 1
      %p217 = por %p215, %p216
      %p219 = scmp.ne.s32.totalorder %s204, %s218
      %p220 = scmp.eq.s32.totalorder %s26, 0
      %p221 = por %p219, %p220
      %s223 = sadd.s32 %s222, 1
      %p226 = scmp.eq.s32.totalorder %s20, 1
      %p227 = scmp.ne.s32.totalorder %s222, %s224
      %p228 = scmp.eq.s32.totalorder %s20, 0
      %p229 = por %p227, %p228
      %p230 = scmp.ne.s32.totalorder %s222, %s224
      %p231 = scmp.eq.s32.totalorder %s25, 1
      %p232 = por %p230, %p231
      %p233 = scmp.ne.s32.totalorder %s224, %s225
      %p234 = scmp.eq.s32.totalorder %s25, 0
      %p235 = por %p233, %p234
      %p236 = scmp.ne.s32.totalorder %s224, %s225
      %p237 = scmp.eq.s32.totalorder %s26, 1
      %p238 = por %p236, %p237
      %p240 = scmp.ne.s32.totalorder %s225, %s239
      %p241 = scmp.eq.s32.totalorder %s26, 0
      %p242 = por %p240, %p241
      %s244 = sadd.s32 %s243, 1
      %p247 = scmp.eq.s32.totalorder %s20, 1
      %p248 = scmp.ne.s32.totalorder %s243, %s245
      %p249 = scmp.eq.s32.totalorder %s20, 0
      %p250 = por %p248, %p249
      %p251 = scmp.ne.s32.totalorder %s243, %s245
      %p252 = scmp.eq.s32.totalorder %s25, 1
      %p253 = por %p251, %p252
      %p254 = scmp.ne.s32.totalorder %s245, %s246
      %p255 = scmp.eq.s32.totalorder %s25, 0
      %p256 = por %p254, %p255
      %p257 = scmp.ne.s32.totalorder %s245, %s246
      %p258 = scmp.eq.s32.totalorder %s26, 1
      %p259 = por %p257, %p258
      %p261 = scmp.ne.s32.totalorder %s246, %s260
      %p262 = scmp.eq.s32.totalorder %s26, 0
      %p263 = por %p261, %p262
      %s264 = ssub.s32 %s20, %s27
      %p265 = scmp.eq.s32.totalorder %s264, 0
      %s267 = sadd.s32 %s266, 1
      %s268 = scalar_select %p265, %s266, %s267
      %p271 = pneg %p265
      %p272 = scmp.eq.s32.totalorder %s20, 1
      %p273 = por %p271, %p272
      %p274 = scmp.ne.s32.totalorder %s266, %s269
      %p275 = scmp.eq.s32.totalorder %s20, 0
      %p276 = por %p274, %p275
      %p277 = scmp.ne.s32.totalorder %s266, %s269
      %p278 = scmp.eq.s32.totalorder %s25, 1
      %p279 = por %p277, %p278
      %p280 = scmp.ne.s32.totalorder %s269, %s270
      %p281 = scmp.eq.s32.totalorder %s25, 0
      %p282 = por %p280, %p281
      %p283 = scmp.ne.s32.totalorder %s269, %s270
      %p284 = scmp.eq.s32.totalorder %s26, 1
      %p285 = por %p283, %p284
      %p287 = scmp.ne.s32.totalorder %s270, %s286
      %p288 = scmp.eq.s32.totalorder %s26, 0
      %p289 = por %p287, %p288
      %p290 = scmp.le.s32.totalorder 1, %s20
      %p291 = scmp.lt.s32.totalorder %s20, 3
      %p292 = pnand %p290, %p291
      %p293 = pneg %p292
      // Predicated region
      $region9: #{tpu_custom_call.1} parent=5 // pred_check
        _
      $region10: #{tpu_custom_call.1} parent=5 // pred_check_branch
        %295 = sbr.rel (%p292) target = $region12
      $region11: #{tpu_custom_call.1} parent=5 // pred_region
        %s296 = ssub.s32 %s20, 1
        // Predicated region
        $region13: #{tpu_custom_call.1} parent=11 // pred_check
          %p297 = pneg %p67
        $region14: #{tpu_custom_call.1} parent=11 // pred_check_branch
          %299 = sbr.rel (%p297) target = $region16
        $region15: #{tpu_custom_call.1} parent=11 // pred_region
          _
        $region16: #{tpu_custom_call.1} parent=11 // pred_fallthru
          _
        // Predicated region
        $region17: #{tpu_custom_call.1} parent=11 // pred_check
          %p300 = pneg %p88
        $region18: #{tpu_custom_call.1} parent=11 // pred_check_branch
          %302 = sbr.rel (%p300) target = $region20
        $region19: #{tpu_custom_call.1} parent=11 // pred_region
          _
        $region20: #{tpu_custom_call.1} parent=11 // pred_fallthru
          _
        // Predicated region
        $region21: #{tpu_custom_call.1} parent=11 // pred_check
          %p303 = pneg %p109
        $region22: #{tpu_custom_call.1} parent=11 // pred_check_branch
          %305 = sbr.rel (%p303) target = $region24
        $region23: #{tpu_custom_call.1} parent=11 // pred_region
          _
        $region24: #{tpu_custom_call.1} parent=11 // pred_fallthru
          _
        // Predicated region
        $region25: #{tpu_custom_call.1} parent=11 // pred_check
          %p306 = pneg %p130
        $region26: #{tpu_custom_call.1} parent=11 // pred_check_branch
          %308 = sbr.rel (%p306) target = $region28
        $region27: #{tpu_custom_call.1} parent=11 // pred_region
          _
        $region28: #{tpu_custom_call.1} parent=11 // pred_fallthru
          _
        // Predicated region
        $region29: #{tpu_custom_call.1} parent=11 // pred_check
          %p309 = pneg %p151
        $region30: #{tpu_custom_call.1} parent=11 // pred_check_branch
          %311 = sbr.rel (%p309) target = $region32
        $region31: #{tpu_custom_call.1} parent=11 // pred_region
          _
        $region32: #{tpu_custom_call.1} parent=11 // pred_fallthru
          _
        // Predicated region
        $region33: #{tpu_custom_call.1} parent=11 // pred_check
          %p312 = pneg %p172
        $region34: #{tpu_custom_call.1} parent=11 // pred_check_branch
          %314 = sbr.rel (%p312) target = $region36
        $region35: #{tpu_custom_call.1} parent=11 // pred_region
          _
        $region36: #{tpu_custom_call.1} parent=11 // pred_fallthru
          _
        // Predicated region
        $region37: #{tpu_custom_call.1} parent=11 // pred_check
          %p315 = pneg %p193
        $region38: #{tpu_custom_call.1} parent=11 // pred_check_branch
          %317 = sbr.rel (%p315) target = $region40
        $region39: #{tpu_custom_call.1} parent=11 // pred_region
          _
        $region40: #{tpu_custom_call.1} parent=11 // pred_fallthru
          _
        // Predicated region
        $region41: #{tpu_custom_call.1} parent=11 // pred_check
          %p318 = pneg %p214
        $region42: #{tpu_custom_call.1} parent=11 // pred_check_branch
          %320 = sbr.rel (%p318) target = $region44
        $region43: #{tpu_custom_call.1} parent=11 // pred_region
          _
        $region44: #{tpu_custom_call.1} parent=11 // pred_fallthru
          _
        // Predicated region
        $region45: #{tpu_custom_call.1} parent=11 // pred_check
          %p321 = pneg %p235
        $region46: #{tpu_custom_call.1} parent=11 // pred_check_branch
          %323 = sbr.rel (%p321) target = $region48
        $region47: #{tpu_custom_call.1} parent=11 // pred_region
          _
        $region48: #{tpu_custom_call.1} parent=11 // pred_fallthru
          _
        // Predicated region
        $region49: #{tpu_custom_call.1} parent=11 // pred_check
          %p324 = pneg %p256
        $region50: #{tpu_custom_call.1} parent=11 // pred_check_branch
          %326 = sbr.rel (%p324) target = $region52
        $region51: #{tpu_custom_call.1} parent=11 // pred_region
          _
        $region52: #{tpu_custom_call.1} parent=11 // pred_fallthru
          _
      $region12: #{tpu_custom_call.1} parent=5 // pred_fallthru
        _
      %p327 = scmp.lt.s32.totalorder %s20, 2
      // Predicated region
      $region53: #{tpu_custom_call.1} parent=5 // pred_check
        %p328 = pneg %p327
      $region54: #{tpu_custom_call.1} parent=5 // pred_check_branch
        %330 = sbr.rel (%p328) target = $region56
      $region55: #{tpu_custom_call.1} parent=5 // pred_region
        // Predicated region
        $region57: #{tpu_custom_call.1} parent=55 // pred_check
          %p331 = pneg %p40
        $region58: #{tpu_custom_call.1} parent=55 // pred_check_branch
          %333 = sbr.rel (%p331) target = $region60
        $region59: #{tpu_custom_call.1} parent=55 // pred_region
          %s334 = smul.u32 2, %s20
          %p335 = scmp.lt.s32.totalorder %s334, 3
          %s336 = scalar_select %p335, %s334, 3
          %s337 = smul.addr %s336, 8
          %s338 = scalar_lea.vmem %s0, %s337
          %s339 = smul.u32 2, %s20
        $region60: #{tpu_custom_call.1} parent=55 // pred_fallthru
          _
      $region56: #{tpu_custom_call.1} parent=5 // pred_fallthru
        _
      %p340 = scmp.le.s32.totalorder 1, %s20
      %p341 = scmp.lt.s32.totalorder %s20, 3
      %p342 = pnand %p340, %p341
      %p343 = pneg %p342
      // Predicated region
      $region61: #{tpu_custom_call.1} parent=5 // pred_check
        _
      $region62: #{tpu_custom_call.1} parent=5 // pred_check_branch
        %345 = sbr.rel (%p342) target = $region64
      $region63: #{tpu_custom_call.1} parent=5 // pred_region
        %s346 = ssub.s32 %s20, 1
        %s347 = smul.u32 2, %s25
        %p348 = scmp.lt.s32.totalorder %s347, 3
        %s349 = scalar_select %p348, %s347, 3
        %s350 = smul.addr %s349, 8
        %s351 = scalar_lea.vmem %s0, %s350
        %p352 = pneg %p46
        %p353 = pneg %p43
        %p354 = pneg %p67
        %p355 = pneg %p64
        %p356 = pneg %p88
        %p357 = pneg %p85
        %p358 = pneg %p109
        %p359 = pneg %p106
        %p360 = pneg %p130
        %p361 = pneg %p127
        %p362 = pneg %p151
        %p363 = pneg %p148
        %p364 = pneg %p172
        %p365 = pneg %p169
        %p366 = pneg %p193
        %p367 = pneg %p190
        %p368 = pneg %p214
        %p369 = pneg %p211
        %p370 = pneg %p235
        %p371 = pneg %p232
        %p372 = pneg %p256
        %p373 = pneg %p253
        %p374 = pneg %p282
        %p375 = pneg %p279
        %s376 = sand.u32 %s269, 1
        %s377 = scalar_lea.sflag [#allocation3], %s376
        %s378 = sand.u32 %s269, 1
        %s379 = smul.addr %s378, 16
        %s380 = scalar_lea.vmem [#allocation2], %s379
        %s381 = smul.u32 2, %s25
        %p382 = scmp.lt.s32.totalorder %s381, 3
        %s383 = scalar_select %p382, %s381, 3
        %s384 = smul.addr %s383, 8
        %s385 = scalar_lea.vmem %s0, %s384
        %s386 = smul.u32 2, %s25
        %s387 = smul.u32 2, %s25
        %v388 = vld [vmem:[%s385] sm:$0xff]
        %v389 = vld [vmem:[%s385 + $0x8] sm:$0xff]
        %v390 = vld [vmem:[%s3] sm:$0xff]
        %v391 = vld [vmem:[%s3 + $0x8] sm:$0xff]
        %v392 = vld [vmem:[%s3 + $0x10] sm:$0xff]
        %v393 = vld [vmem:[%s3 + $0x18] sm:$0xff]
        %v394 = vld [vmem:[%s3 + $0x20] sm:$0xff]
        %v395 = vld [vmem:[%s3 + $0x28] sm:$0xff]
        %v396 = vld [vmem:[%s3 + $0x30] sm:$0xff]
        %v397 = vld [vmem:[%s3 + $0x38] sm:$0xff]
        %v398 = vld [vmem:[%s3 + $0x40] sm:$0xff]
        %v399 = vld [vmem:[%s3 + $0x48] sm:$0xff]
        %v400 = vld [vmem:[%s3 + $0x50] sm:$0xff]
        %v401 = vld [vmem:[%s3 + $0x58] sm:$0xff]
        %v402 = vld [vmem:[%s3 + $0x60] sm:$0xff]
        %v403 = vld [vmem:[%s3 + $0x68] sm:$0xff]
        %v404 = vld [vmem:[%s3 + $0x70] sm:$0xff]
        %v405 = vld [vmem:[%s3 + $0x78] sm:$0xff]
        %v406 = vld [vmem:[%s4] sm:$0xff]
        %v407 = vld [vmem:[%s4 + $0x8] sm:$0xff]
        %v408 = vld [vmem:[%s4 + $0x10] sm:$0xff]
        %v409 = vld [vmem:[%s4 + $0x18] sm:$0xff]
        %v410 = vld [vmem:[%s4 + $0x20] sm:$0xff]
        %v411 = vld [vmem:[%s4 + $0x28] sm:$0xff]
        %v412 = vld [vmem:[%s4 + $0x30] sm:$0xff]
        %v413 = vld [vmem:[%s4 + $0x38] sm:$0xff]
        %v414 = vld [vmem:[%s4 + $0x40] sm:$0xff]
        %v415 = vld [vmem:[%s4 + $0x48] sm:$0xff]
        %v416 = vld [vmem:[%s4 + $0x50] sm:$0xff]
        %v417 = vld [vmem:[%s4 + $0x58] sm:$0xff]
        %v418 = vld [vmem:[%s4 + $0x60] sm:$0xff]
        %v419 = vld [vmem:[%s4 + $0x68] sm:$0xff]
        %v420 = vld [vmem:[%s4 + $0x70] sm:$0xff]
        %v421 = vld [vmem:[%s4 + $0x78] sm:$0xff]
        %422 = vmatprep.subr.mxu0 0.0
        %423 = vmatpush1.msra.mxu0 %v421
        %424 = vmatprep.subr.mxu0 0.0
        %425 = vmatpush1.msra.mxu0 %v420
        %426 = vmatprep.subr.mxu0 0.0
        %427 = vmatpush1.msra.mxu0 %v419
        %428 = vmatprep.subr.mxu0 0.0
        %429 = vmatpush1.msra.mxu0 %v418
        %430 = vmatprep.subr.mxu0 0.0
        %431 = vmatpush1.msra.mxu0 %v417
        %432 = vmatprep.subr.mxu0 0.0
        %433 = vmatpush1.msra.mxu0 %v416
        %434 = vmatprep.subr.mxu0 0.0
        %435 = vmatpush1.msra.mxu0 %v415
        %436 = vmatprep.subr.mxu0 0.0
        %437 = vmatpush1.msra.mxu0 %v414
        %438 = vmatprep.subr.mxu0 0.0
        %439 = vmatpush1.msra.mxu0 %v413
        %440 = vmatprep.subr.mxu0 0.0
        %441 = vmatpush1.msra.mxu0 %v412
        %442 = vmatprep.subr.mxu0 0.0
        %443 = vmatpush1.msra.mxu0 %v411
        %444 = vmatprep.subr.mxu0 0.0
        %445 = vmatpush1.msra.mxu0 %v410
        %446 = vmatprep.subr.mxu0 0.0
        %447 = vmatpush1.msra.mxu0 %v409
        %448 = vmatprep.subr.mxu0 0.0
        %449 = vmatpush1.msra.mxu0 %v408
        %450 = vmatprep.subr.mxu0 0.0
        %451 = vmatpush1.msra.mxu0 %v407
        %452 = vmatprep.subr.mxu0 0.0
        %453 = vmatpush1.msra.mxu0 %v406
        %454 = vmatprep.subr.mxu0 0.0
        %455 = vmatpush2.msra.mxu0 0.0
        %456 = vmatprep.subr.mxu0 0.0
        %457 = vmatpush2.msra.mxu0 0.0
        %458 = vmatprep.subr.mxu0 0.0
        %459 = vmatpush2.msra.mxu0 0.0
        %460 = vmatprep.subr.mxu0 0.0
        %461 = vmatpush2.msra.mxu0 0.0
        %462 = vmatprep.subr.mxu0 0.0
        %463 = vmatpush2.msra.mxu0 0.0
        %464 = vmatprep.subr.mxu0 0.0
        %465 = vmatpush2.msra.mxu0 0.0
        %466 = vmatprep.subr.mxu0 0.0
        %467 = vmatpush2.msra.mxu0 0.0
        %468 = vmatprep.subr.mxu0 0.0
        %469 = vmatpush2.msra.mxu0 0.0
        %470 = vmatprep.subr.mxu0 0.0
        %471 = vmatpush2.msra.mxu0 0.0
        %472 = vmatprep.subr.mxu0 0.0
        %473 = vmatpush2.msra.mxu0 0.0
        %474 = vmatprep.subr.mxu0 0.0
        %475 = vmatpush2.msra.mxu0 0.0
        %476 = vmatprep.subr.mxu0 0.0
        %477 = vmatpush2.msra.mxu0 0.0
        %478 = vmatprep.subr.mxu0 0.0
        %479 = vmatpush2.msra.mxu0 0.0
        %480 = vmatprep.subr.mxu0 0.0
        %481 = vmatpush2.msra.mxu0 0.0
        %482 = vmatprep.subr.mxu0 0.0
        %483 = vmatpush2.msra.mxu0 0.0
        %484 = vmatprep.subr.mxu0 0.0
        %485 = vmatpush2.msra.mxu0 0.0
        %486 = vmatprep.mubr.f32.mxu0 0.0
        %487 = vmatmul.mubr.f32.gmra.mxu0 %v388
        %v488 = vpop.f32.mrf.mxu0
        %v489 = vadd.f32 0.0, %v488
        %v490 = vpop.f32.mrf.mxu0
        %491 = vmatprep.mubr.f32.mxu0 0.0
        %492 = vmatmul.mubr.f32.gmra.mxu0 %v389
        %v493 = vpop.f32.mrf.mxu0
        %v494 = vadd.f32 0.0, %v493
        %v495 = vpop.f32.mrf.mxu0
        %496 = vdwg.mxu0
        %v497 = vld [vmem:[%s5] sm:$0xff]
        %v498 = vld [vmem:[%s5 + $0x8] sm:$0xff]
        %v499 = vld [vmem:[%s5 + $0x10] sm:$0xff]
        %v500 = vld [vmem:[%s5 + $0x18] sm:$0xff]
        %v501 = vld [vmem:[%s5 + $0x20] sm:$0xff]
        %v502 = vld [vmem:[%s5 + $0x28] sm:$0xff]
        %v503 = vld [vmem:[%s5 + $0x30] sm:$0xff]
        %v504 = vld [vmem:[%s5 + $0x38] sm:$0xff]
        %v505 = vld [vmem:[%s5 + $0x40] sm:$0xff]
        %v506 = vld [vmem:[%s5 + $0x48] sm:$0xff]
        %v507 = vld [vmem:[%s5 + $0x50] sm:$0xff]
        %v508 = vld [vmem:[%s5 + $0x58] sm:$0xff]
        %v509 = vld [vmem:[%s5 + $0x60] sm:$0xff]
        %v510 = vld [vmem:[%s5 + $0x68] sm:$0xff]
        %v511 = vld [vmem:[%s5 + $0x70] sm:$0xff]
        %v512 = vld [vmem:[%s5 + $0x78] sm:$0xff]
        %513 = vmatprep.subr.mxu0 0.0
        %514 = vmatpush1.msra.mxu0 %v512
        %515 = vmatprep.subr.mxu0 0.0
        %516 = vmatpush1.msra.mxu0 %v511
        %517 = vmatprep.subr.mxu0 0.0
        %518 = vmatpush1.msra.mxu0 %v510
        %519 = vmatprep.subr.mxu0 0.0
        %520 = vmatpush1.msra.mxu0 %v509
        %521 = vmatprep.subr.mxu0 0.0
        %522 = vmatpush1.msra.mxu0 %v508
        %523 = vmatprep.subr.mxu0 0.0
        %524 = vmatpush1.msra.mxu0 %v507
        %525 = vmatprep.subr.mxu0 0.0
        %526 = vmatpush1.msra.mxu0 %v506
        %527 = vmatprep.subr.mxu0 0.0
        %528 = vmatpush1.msra.mxu0 %v505
        %529 = vmatprep.subr.mxu0 0.0
        %530 = vmatpush1.msra.mxu0 %v504
        %531 = vmatprep.subr.mxu0 0.0
        %532 = vmatpush1.msra.mxu0 %v503
        %533 = vmatprep.subr.mxu0 0.0
        %534 = vmatpush1.msra.mxu0 %v502
        %535 = vmatprep.subr.mxu0 0.0
        %536 = vmatpush1.msra.mxu0 %v501
        %537 = vmatprep.subr.mxu0 0.0
        %538 = vmatpush1.msra.mxu0 %v500
        %539 = vmatprep.subr.mxu0 0.0
        %540 = vmatpush1.msra.mxu0 %v499
        %541 = vmatprep.subr.mxu0 0.0
        %542 = vmatpush1.msra.mxu0 %v498
        %543 = vmatprep.subr.mxu0 0.0
        %544 = vmatpush1.msra.mxu0 %v497
        %545 = vmatprep.subr.mxu0 0.0
        %546 = vmatpush2.msra.mxu0 0.0
        %547 = vmatprep.subr.mxu0 0.0
        %548 = vmatpush2.msra.mxu0 0.0
        %549 = vmatprep.subr.mxu0 0.0
        %550 = vmatpush2.msra.mxu0 0.0
        %551 = vmatprep.subr.mxu0 0.0
        %552 = vmatpush2.msra.mxu0 0.0
        %553 = vmatprep.subr.mxu0 0.0
        %554 = vmatpush2.msra.mxu0 0.0
        %555 = vmatprep.subr.mxu0 0.0
        %556 = vmatpush2.msra.mxu0 0.0
        %557 = vmatprep.subr.mxu0 0.0
        %558 = vmatpush2.msra.mxu0 0.0
        %559 = vmatprep.subr.mxu0 0.0
        %560 = vmatpush2.msra.mxu0 0.0
        %561 = vmatprep.subr.mxu0 0.0
        %562 = vmatpush2.msra.mxu0 0.0
        %563 = vmatprep.subr.mxu0 0.0
        %564 = vmatpush2.msra.mxu0 0.0
        %565 = vmatprep.subr.mxu0 0.0
        %566 = vmatpush2.msra.mxu0 0.0
        %567 = vmatprep.subr.mxu0 0.0
        %568 = vmatpush2.msra.mxu0 0.0
        %569 = vmatprep.subr.mxu0 0.0
        %570 = vmatpush2.msra.mxu0 0.0
        %571 = vmatprep.subr.mxu0 0.0
        %572 = vmatpush2.msra.mxu0 0.0
        %573 = vmatprep.subr.mxu0 0.0
        %574 = vmatpush2.msra.mxu0 0.0
        %575 = vmatprep.subr.mxu0 0.0
        %576 = vmatpush2.msra.mxu0 0.0
        %577 = vmatprep.mubr.f32.mxu0 0.0
        %578 = vmatmul.mubr.f32.gmra.mxu0 %v388
        %v579 = vpop.f32.mrf.mxu0
        %v580 = vadd.f32 0.0, %v579
        %v581 = vpop.f32.mrf.mxu0
        %582 = vmatprep.mubr.f32.mxu0 0.0
        %583 = vmatmul.mubr.f32.gmra.mxu0 %v389
        %v584 = vpop.f32.mrf.mxu0
        %v585 = vadd.f32 0.0, %v584
        %v586 = vpop.f32.mrf.mxu0
        %587 = vdwg.mxu0
        %v588 = vld [vmem:[%s6] sm:$0x1]
        %v590 = vlaneseq
        %v591 = vshrl.u32 %v590, 7
        %v592 = vsub.s32 0, %v591
        %v593 = vrot.slane %v588, %v592
        %595 = vmatprep.subr.mxu0 0.0
        %596 = vmatpush1.msra.mxu0 %v405
        %597 = vmatprep.subr.mxu0 0.0
        %598 = vmatpush1.msra.mxu0 %v404
        %599 = vmatprep.subr.mxu0 0.0
        %600 = vmatpush1.msra.mxu0 %v403
        %601 = vmatprep.subr.mxu0 0.0
        %602 = vmatpush1.msra.mxu0 %v402
        %603 = vmatprep.subr.mxu0 0.0
        %604 = vmatpush1.msra.mxu0 %v401
        %605 = vmatprep.subr.mxu0 0.0
        %606 = vmatpush1.msra.mxu0 %v400
        %607 = vmatprep.subr.mxu0 0.0
        %608 = vmatpush1.msra.mxu0 %v399
        %609 = vmatprep.subr.mxu0 0.0
        %610 = vmatpush1.msra.mxu0 %v398
        %611 = vmatprep.subr.mxu0 0.0
        %612 = vmatpush1.msra.mxu0 %v397
        %613 = vmatprep.subr.mxu0 0.0
        %614 = vmatpush1.msra.mxu0 %v396
        %615 = vmatprep.subr.mxu0 0.0
        %616 = vmatpush1.msra.mxu0 %v395
        %617 = vmatprep.subr.mxu0 0.0
        %618 = vmatpush1.msra.mxu0 %v394
        %619 = vmatprep.subr.mxu0 0.0
        %620 = vmatpush1.msra.mxu0 %v393
        %621 = vmatprep.subr.mxu0 0.0
        %622 = vmatpush1.msra.mxu0 %v392
        %623 = vmatprep.subr.mxu0 0.0
        %624 = vmatpush1.msra.mxu0 %v391
        %625 = vmatprep.subr.mxu0 0.0
        %626 = vmatpush1.msra.mxu0 %v390
        %627 = vmatprep.subr.mxu0 0.0
        %628 = vmatpush2.msra.mxu0 0.0
        %629 = vmatprep.subr.mxu0 0.0
        %630 = vmatpush2.msra.mxu0 0.0
        %631 = vmatprep.subr.mxu0 0.0
        %632 = vmatpush2.msra.mxu0 0.0
        %633 = vmatprep.subr.mxu0 0.0
        %634 = vmatpush2.msra.mxu0 0.0
        %635 = vmatprep.subr.mxu0 0.0
        %636 = vmatpush2.msra.mxu0 0.0
        %637 = vmatprep.subr.mxu0 0.0
        %638 = vmatpush2.msra.mxu0 0.0
        %639 = vmatprep.subr.mxu0 0.0
        %640 = vmatpush2.msra.mxu0 0.0
        %641 = vmatprep.subr.mxu0 0.0
        %642 = vmatpush2.msra.mxu0 0.0
        %643 = vmatprep.subr.mxu0 0.0
        %644 = vmatpush2.msra.mxu0 0.0
        %645 = vmatprep.subr.mxu0 0.0
        %646 = vmatpush2.msra.mxu0 0.0
        %647 = vmatprep.subr.mxu0 0.0
        %648 = vmatpush2.msra.mxu0 0.0
        %649 = vmatprep.subr.mxu0 0.0
        %650 = vmatpush2.msra.mxu0 0.0
        %651 = vmatprep.subr.mxu0 0.0
        %652 = vmatpush2.msra.mxu0 0.0
        %653 = vmatprep.subr.mxu0 0.0
        %654 = vmatpush2.msra.mxu0 0.0
        %655 = vmatprep.subr.mxu0 0.0
        %656 = vmatpush2.msra.mxu0 0.0
        %657 = vmatprep.subr.mxu0 0.0
        %658 = vmatpush2.msra.mxu0 0.0
        %659 = vmatprep.mubr.f32.mxu0 0.0
        %660 = vmatmul.mubr.f32.gmra.mxu0 %v388
        %v661 = vpop.f32.mrf.mxu0
        %v662 = vadd.f32 %v593, %v661
        %v663 = vpop.f32.mrf.mxu0
        %664 = vmatprep.mubr.f32.mxu0 0.0
        %665 = vmatmul.mubr.f32.gmra.mxu0 %v389
        %v666 = vpop.f32.mrf.mxu0
        %v667 = vadd.f32 %v593, %v666
        %v668 = vpop.f32.mrf.mxu0
        %669 = vdwg.mxu0
        %v670 = vld [vmem:[%s1] sm:$0xff]
        %v671 = vld [vmem:[%s1 + $0x8] sm:$0xff]
        %v672 = vrot.slane %v489, 7
        %v673 = vrot.slane %v494, 7
        %v674 = vlaneseq
        %v675 = vshrl.u32 %v674, 7
        %vm676 = vcmp.lt.s32.totalorder %v675, 1
        %v677 = vsel %vm676, %v672, %v673
        %v678 = vsel %vm676, %v673, %v672
        %680 = vset.pattern.permute.xlu0 0
        %681 = vperm.xlu0 %680, %v670
        %v682 = vpop.permute.xlu0 %681
        %685 = vset.pattern.permute.xlu0 0
        %686 = vperm.xlu0 %685, %v671
        %v687 = vpop.permute.xlu0 %686
        %v689 = vmul.f32 %v682, %v678
        %v690 = vmul.f32 %v687, %v677
        %v691 = vadd.f32 %v662, %v689
        %v692 = vadd.f32 %v667, %v690
        %v693 = vld [vmem:[%s2] sm:$0xff]
        %v694 = vld [vmem:[%s2 + $0x8] sm:$0xff]
        %v695 = vrot.slane %v580, 1
        %v696 = vrot.slane %v585, 1
        %vm697 = vcmp.lt.s32.totalorder %v675, 7
        %v698 = vsel %vm697, %v695, %v696
        %v699 = vsel %vm697, %v696, %v695
        %701 = vset.pattern.permute.xlu0 0
        %702 = vperm.xlu0 %701, %v693
        %v703 = vpop.permute.xlu0 %702
        %706 = vset.pattern.permute.xlu0 0
        %707 = vperm.xlu0 %706, %v694
        %v708 = vpop.permute.xlu0 %707
        %v710 = vmul.f32 %v703, %v698
        %v711 = vmul.f32 %v708, %v699
        %v712 = vadd.f32 %v691, %v710
        %v713 = vadd.f32 %v692, %v711
        %v714 = vmax.f32 %v712, 0.0
        %v715 = vmax.f32 %v713, 0.0
        %vm716 = vcmask 523264
        %v717 = vsel %vm716, %v714, 0.0
        %v718 = vrot.slane %v717, 4
        %v719 = vadd.f32 %v717, %v718
        %v720 = vrot.slane %v719, 2
        %v721 = vadd.f32 %v719, %v720
        %v722 = vrot.slane %v721, 1
        %v723 = vadd.f32 %v721, %v722
        %v724 = vsel %vm716, %v715, 0.0
        %v725 = vrot.slane %v724, 4
        %v726 = vadd.f32 %v724, %v725
        %v727 = vrot.slane %v726, 2
        %v728 = vadd.f32 %v726, %v727
        %v729 = vrot.slane %v728, 1
        %v730 = vadd.f32 %v728, %v729
        %v731 = vld [vmem:[%s7] sm:$0xff]
        %v732 = vld [vmem:[%s7 + $0x8] sm:$0xff]
        %v733 = vld [vmem:[%s7 + $0x10] sm:$0xff]
        %v734 = vld [vmem:[%s7 + $0x18] sm:$0xff]
        %v735 = vld [vmem:[%s7 + $0x20] sm:$0xff]
        %v736 = vld [vmem:[%s7 + $0x28] sm:$0xff]
        %v737 = vld [vmem:[%s7 + $0x30] sm:$0xff]
        %v738 = vld [vmem:[%s7 + $0x38] sm:$0xff]
        %v739 = vld [vmem:[%s8] sm:$0x1]
        %v741 = vlaneseq
        %v742 = vshrl.u32 %v741, 7
        %v743 = vsub.s32 0, %v742
        %v744 = vrot.slane %v739, %v743
        %vm748 = vcmask 1041409
        %v749 = vsel %vm748, %v730, %v723
        %v750 = vsel %vm716, %v749, 0
        %752 = vmatprep.subr.mxu0 0.0
        %753 = vmatpush1.msra.mxu0 0.0
        %754 = vmatprep.subr.mxu0 0.0
        %755 = vmatpush1.msra.mxu0 0.0
        %756 = vmatprep.subr.mxu0 0.0
        %757 = vmatpush1.msra.mxu0 0.0
        %758 = vmatprep.subr.mxu0 0.0
        %759 = vmatpush1.msra.mxu0 0.0
        %760 = vmatprep.subr.mxu0 0.0
        %761 = vmatpush1.msra.mxu0 0.0
        %762 = vmatprep.subr.mxu0 0.0
        %763 = vmatpush1.msra.mxu0 0.0
        %764 = vmatprep.subr.mxu0 0.0
        %765 = vmatpush1.msra.mxu0 0.0
        %766 = vmatprep.subr.mxu0 0.0
        %767 = vmatpush1.msra.mxu0 0.0
        %768 = vmatprep.subr.mxu0 0.0
        %769 = vmatpush1.msra.mxu0 %v738
        %770 = vmatprep.subr.mxu0 0.0
        %771 = vmatpush1.msra.mxu0 %v737
        %772 = vmatprep.subr.mxu0 0.0
        %773 = vmatpush1.msra.mxu0 %v736
        %774 = vmatprep.subr.mxu0 0.0
        %775 = vmatpush1.msra.mxu0 %v735
        %776 = vmatprep.subr.mxu0 0.0
        %777 = vmatpush1.msra.mxu0 %v734
        %778 = vmatprep.subr.mxu0 0.0
        %779 = vmatpush1.msra.mxu0 %v733
        %780 = vmatprep.subr.mxu0 0.0
        %781 = vmatpush1.msra.mxu0 %v732
        %782 = vmatprep.subr.mxu0 0.0
        %783 = vmatpush1.msra.mxu0 %v731
        %784 = vmatprep.subr.mxu0 0.0
        %785 = vmatpush2.msra.mxu0 0.0
        %786 = vmatprep.subr.mxu0 0.0
        %787 = vmatpush2.msra.mxu0 0.0
        %788 = vmatprep.subr.mxu0 0.0
        %789 = vmatpush2.msra.mxu0 0.0
        %790 = vmatprep.subr.mxu0 0.0
        %791 = vmatpush2.msra.mxu0 0.0
        %792 = vmatprep.subr.mxu0 0.0
        %793 = vmatpush2.msra.mxu0 0.0
        %794 = vmatprep.subr.mxu0 0.0
        %795 = vmatpush2.msra.mxu0 0.0
        %796 = vmatprep.subr.mxu0 0.0
        %797 = vmatpush2.msra.mxu0 0.0
        %798 = vmatprep.subr.mxu0 0.0
        %799 = vmatpush2.msra.mxu0 0.0
        %800 = vmatprep.subr.mxu0 0.0
        %801 = vmatpush2.msra.mxu0 0.0
        %802 = vmatprep.subr.mxu0 0.0
        %803 = vmatpush2.msra.mxu0 0.0
        %804 = vmatprep.subr.mxu0 0.0
        %805 = vmatpush2.msra.mxu0 0.0
        %806 = vmatprep.subr.mxu0 0.0
        %807 = vmatpush2.msra.mxu0 0.0
        %808 = vmatprep.subr.mxu0 0.0
        %809 = vmatpush2.msra.mxu0 0.0
        %810 = vmatprep.subr.mxu0 0.0
        %811 = vmatpush2.msra.mxu0 0.0
        %812 = vmatprep.subr.mxu0 0.0
        %813 = vmatpush2.msra.mxu0 0.0
        %814 = vmatprep.subr.mxu0 0.0
        %815 = vmatpush2.msra.mxu0 0.0
        %816 = vmatprep.mubr.f32.mxu0 0.0
        %817 = vmatmul.mubr.f32.gmra.mxu0 %v750
        %v818 = vpop.f32.mrf.mxu0
        %v819 = vadd.f32 %v744, %v818
        %v820 = vpop.f32.mrf.mxu0
        %821 = vdwg.mxu0
        %v822 = vld [vmem:[%s9] sm:$0xff]
        %v823 = vld [vmem:[%s9 + $0x8] sm:$0xff]
        %v824 = vld [vmem:[%s9 + $0x10] sm:$0xff]
        %v825 = vld [vmem:[%s9 + $0x18] sm:$0xff]
        %v826 = vld [vmem:[%s9 + $0x20] sm:$0xff]
        %v827 = vld [vmem:[%s9 + $0x28] sm:$0xff]
        %v828 = vld [vmem:[%s9 + $0x30] sm:$0xff]
        %v829 = vld [vmem:[%s9 + $0x38] sm:$0xff]
        %v830 = vld [vmem:[%s10] sm:$0x1]
        %v832 = vlaneseq
        %v833 = vshrl.u32 %v832, 7
        %v834 = vsub.s32 0, %v833
        %v835 = vrot.slane %v830, %v834
        %837 = vmatprep.subr.mxu0 0.0
        %838 = vmatpush1.msra.mxu0 0.0
        %839 = vmatprep.subr.mxu0 0.0
        %840 = vmatpush1.msra.mxu0 0.0
        %841 = vmatprep.subr.mxu0 0.0
        %842 = vmatpush1.msra.mxu0 0.0
        %843 = vmatprep.subr.mxu0 0.0
        %844 = vmatpush1.msra.mxu0 0.0
        %845 = vmatprep.subr.mxu0 0.0
        %846 = vmatpush1.msra.mxu0 0.0
        %847 = vmatprep.subr.mxu0 0.0
        %848 = vmatpush1.msra.mxu0 0.0
        %849 = vmatprep.subr.mxu0 0.0
        %850 = vmatpush1.msra.mxu0 0.0
        %851 = vmatprep.subr.mxu0 0.0
        %852 = vmatpush1.msra.mxu0 0.0
        %853 = vmatprep.subr.mxu0 0.0
        %854 = vmatpush1.msra.mxu0 %v829
        %855 = vmatprep.subr.mxu0 0.0
        %856 = vmatpush1.msra.mxu0 %v828
        %857 = vmatprep.subr.mxu0 0.0
        %858 = vmatpush1.msra.mxu0 %v827
        %859 = vmatprep.subr.mxu0 0.0
        %860 = vmatpush1.msra.mxu0 %v826
        %861 = vmatprep.subr.mxu0 0.0
        %862 = vmatpush1.msra.mxu0 %v825
        %863 = vmatprep.subr.mxu0 0.0
        %864 = vmatpush1.msra.mxu0 %v824
        %865 = vmatprep.subr.mxu0 0.0
        %866 = vmatpush1.msra.mxu0 %v823
        %867 = vmatprep.subr.mxu0 0.0
        %868 = vmatpush1.msra.mxu0 %v822
        %869 = vmatprep.subr.mxu0 0.0
        %870 = vmatpush2.msra.mxu0 0.0
        %871 = vmatprep.subr.mxu0 0.0
        %872 = vmatpush2.msra.mxu0 0.0
        %873 = vmatprep.subr.mxu0 0.0
        %874 = vmatpush2.msra.mxu0 0.0
        %875 = vmatprep.subr.mxu0 0.0
        %876 = vmatpush2.msra.mxu0 0.0
        %877 = vmatprep.subr.mxu0 0.0
        %878 = vmatpush2.msra.mxu0 0.0
        %879 = vmatprep.subr.mxu0 0.0
        %880 = vmatpush2.msra.mxu0 0.0
        %881 = vmatprep.subr.mxu0 0.0
        %882 = vmatpush2.msra.mxu0 0.0
        %883 = vmatprep.subr.mxu0 0.0
        %884 = vmatpush2.msra.mxu0 0.0
        %885 = vmatprep.subr.mxu0 0.0
        %886 = vmatpush2.msra.mxu0 0.0
        %887 = vmatprep.subr.mxu0 0.0
        %888 = vmatpush2.msra.mxu0 0.0
        %889 = vmatprep.subr.mxu0 0.0
        %890 = vmatpush2.msra.mxu0 0.0
        %891 = vmatprep.subr.mxu0 0.0
        %892 = vmatpush2.msra.mxu0 0.0
        %893 = vmatprep.subr.mxu0 0.0
        %894 = vmatpush2.msra.mxu0 0.0
        %895 = vmatprep.subr.mxu0 0.0
        %896 = vmatpush2.msra.mxu0 0.0
        %897 = vmatprep.subr.mxu0 0.0
        %898 = vmatpush2.msra.mxu0 0.0
        %899 = vmatprep.subr.mxu0 0.0
        %900 = vmatpush2.msra.mxu0 0.0
        %901 = vmatprep.mubr.f32.mxu0 0.0
        %902 = vmatmul.mubr.f32.gmra.mxu0 %v750
        %v903 = vpop.f32.mrf.mxu0
        %v904 = vadd.f32 %v835, %v903
        %v905 = vpop.f32.mrf.mxu0
        %906 = vdwg.mxu0
        %v909 = vunpack.c.l.s4 1966171168
        %v910 = vunpack.c.0.s8 %v909
        %v911 = vlaneseq
        %v912 = vshrl.u32 %v911, 7
        %v913 = vsub.s32 %v910, %v912
        %v914 = vrot.slane %v819, %v913
        %v915 = vcombine.high %v914, %v914
        %v917 = vunpack.c.l.s4 1966171168
        %v918 = vunpack.c.0.s8 %v917
        %v919 = vlaneseq
        %v920 = vshrl.u32 %v919, 7
        %v921 = vsub.s32 %v918, %v920
        %v922 = vrot.slane %v914, %v921
        %v924 = vunpack.c.l.s4 1966171168
        %v925 = vunpack.c.0.s8 %v924
        %v926 = vlaneseq
        %v927 = vshrl.u32 %v926, 7
        %v928 = vsub.s32 %v925, %v927
        %v929 = vrot.slane %v915, %v928
        %v930 = vlaneseq
        %v931 = vshrl.u32 %v930, 7
        %v932 = vsub.s32 0, %v931
        %v933 = vrot.slane %v922, %v932
        %v934 = vlaneseq
        %v935 = vshrl.u32 %v934, 7
        %v936 = vsub.s32 0, %v935
        %v937 = vrot.slane %v929, %v936
        %v940 = vmul.f32 %v388, %v933
        %v941 = vmul.f32 %v389, %v937
        %v944 = vunpack.c.l.s4 1966171168
        %v945 = vunpack.c.0.s8 %v944
        %v946 = vlaneseq
        %v947 = vshrl.u32 %v946, 7
        %v948 = vsub.s32 %v945, %v947
        %v949 = vrot.slane %v904, %v948
        %v950 = vcombine.high %v949, %v949
        %v952 = vunpack.c.l.s4 1966171168
        %v953 = vunpack.c.0.s8 %v952
        %v954 = vlaneseq
        %v955 = vshrl.u32 %v954, 7
        %v956 = vsub.s32 %v953, %v955
        %v957 = vrot.slane %v949, %v956
        %v959 = vunpack.c.l.s4 1966171168
        %v960 = vunpack.c.0.s8 %v959
        %v961 = vlaneseq
        %v962 = vshrl.u32 %v961, 7
        %v963 = vsub.s32 %v960, %v962
        %v964 = vrot.slane %v950, %v963
        %v965 = vlaneseq
        %v966 = vshrl.u32 %v965, 7
        %v967 = vsub.s32 0, %v966
        %v968 = vrot.slane %v957, %v967
        %v969 = vlaneseq
        %v970 = vshrl.u32 %v969, 7
        %v971 = vsub.s32 0, %v970
        %v972 = vrot.slane %v964, %v971
        %v975 = vadd.f32 %v940, %v968
        %v976 = vadd.f32 %v941, %v972
        %977 = vst [vmem:[%s380] sm:$0xff] %v975
        %978 = vst [vmem:[%s380 + $0x8] sm:$0xff] %v976
        %s979 = sand.u32 %s269, 1
        %s980 = scalar_lea.sflag [#allocation3], %s979
        %s981 = sand.u32 %s269, 1
        %s982 = smul.addr %s981, 16
        %s983 = scalar_lea.vmem [#allocation2], %s982
        // Predicated region
        $region65: #{tpu_custom_call.1} parent=63 // pred_check
          %p984 = pneg %p279
        $region66: #{tpu_custom_call.1} parent=63 // pred_check_branch
          %986 = sbr.rel (%p984) target = $region68
        $region67: #{tpu_custom_call.1} parent=63 // pred_region
          %s987 = smul.u32 2, %s25
          %s989 = ssub.s32 256, 256
          %990 = vsyncadd %s980, %s989
          %s991 = smul.addr %s987, 128
          %s992 = scalar_lea.hbm %s11, %s991
          %s993 = sshll.u32 %s983, 4
          %s994 = int_to_ptr.vmem [resolvable:$true] %s993
          %999 = dma.vmem_to_hbm [thread:$0]  %s994, 256, %s992, %s980, 128, 128, 8
        $region68: #{tpu_custom_call.1} parent=63 // pred_fallthru
          _
      $region64: #{tpu_custom_call.1} parent=5 // pred_fallthru
        _
      %p1000 = scmp.le.s32.totalorder 2, %s20
      // Predicated region
      $region69: #{tpu_custom_call.1} parent=5 // pred_check
        %p1001 = pneg %p1000
      $region70: #{tpu_custom_call.1} parent=5 // pred_check_branch
        %1003 = sbr.rel (%p1001) target = $region72
      $region71: #{tpu_custom_call.1} parent=5 // pred_region
        %s1004 = ssub.s32 %s20, 2
        // Predicated region
        $region73: #{tpu_custom_call.1} parent=71 // pred_check
          %p1005 = pneg %p285
        $region74: #{tpu_custom_call.1} parent=71 // pred_check_branch
          %1007 = sbr.rel (%p1005) target = $region76
        $region75: #{tpu_custom_call.1} parent=71 // pred_region
          %s1008 = sand.u32 %s270, 1
          %s1009 = scalar_lea.sflag [#allocation3], %s1008
          %s1010 = sand.u32 %s270, 1
          %s1011 = smul.addr %s1010, 16
          %s1012 = scalar_lea.vmem [#allocation2], %s1011
          %1013 = dma.done %s1009, 256
        $region76: #{tpu_custom_call.1} parent=71 // pred_fallthru
          _
      $region72: #{tpu_custom_call.1} parent=5 // pred_fallthru
        _
    $region6: #{tpu_custom_call.1} parent=1 // loop_footer
      %s24 = sadd.s32 1, %s20
    $region7: #{tpu_custom_call.1} parent=1 // loop_footer_branch
      %19 = sbr.rel target = $region3
    $region8: #{tpu_custom_call.1} parent=1 // loop_exit
      _
    %1014 = vsyncpa [#allocation3], 1
    %s1015 = scalar_lea.sflag [#allocation3], 1
    %1016 = vsyncpa %s1015, 1

</llo_original>
